<compile_context>
chip_gen: v6e
topology: v6e:2x2x1
jax: 0.10.0
libtpu: 0.0.40
codegen_flags: <defaults>
</compile_context>

<pallas_src>
import functools

import jax
import jax.numpy as jnp
from jax.experimental import pallas as pl
from jax.experimental.pallas import tpu as pltpu


def _moving_avg_kernel(x_ref, o_ref, acc_ref, *,
                       kernel_size, stride, front_len, end_len, l_out):
    # x_ref:   (bb, L, tc)  unpadded input tile, native dtype
    # o_ref:   (bb, l_out, tc)
    # acc_ref: (bb, L, tc)  f32 scratch accumulator (stride-1 window sums)
    bb, l_in, tc = x_ref.shape

    # Tap d == 0 (j == front_len) covers every output row: use it to initialise the
    # accumulator (saves an explicit zero pass).  Only the accumulator is f32-wide;
    # the input tile itself is never up-cast wholesale.
    acc_ref[...] = x_ref[...].astype(jnp.float32)

    # Remaining taps: add the in-bounds slice of x for each window offset.  Rows
    # whose window sticks out of [0, L) are fixed up below with a scalar multiple of
    # the replicated edge row -- the padded signal is never materialised.
    for j in range(kernel_size):
        if j == front_len:
            continue
        d = j - front_len
        lo = max(0, -d)                 # first output row this tap hits in-bounds
        hi = min(l_in, l_in - d)        # one past last
        n = hi - lo
        if n <= 0:
            continue
        src_lo = lo + d
        acc_ref[:, lo:hi, :] += x_ref[:, src_lo:src_lo + n, :].astype(jnp.float32)

    # Front edge: output row i (< front_len) sees (front_len - i) replicated copies
    # of x[:, 0, :].
    n_front = min(front_len, l_in)
    if n_front > 0:
        idx = jax.lax.broadcasted_iota(jnp.int32, (1, n_front, tc), 1)
        w = float(front_len) - idx.astype(jnp.float32)
        acc_ref[:, 0:n_front, :] += w * x_ref[:, 0:1, :].astype(jnp.float32)

    # End edge: output row i (>= L - end_len) sees (i + end_len + 1 - L) replicated
    # copies of x[:, -1, :].
    e_start = max(0, l_in - end_len)
    n_end = l_in - e_start
    if end_len > 0 and n_end > 0:
        base = float(e_start + end_len + 1 - l_in)
        idx = jax.lax.broadcasted_iota(jnp.int32, (1, n_end, tc), 1)
        w = base + idx.astype(jnp.float32)
        acc_ref[:, e_start:l_in, :] += w * x_ref[:, l_in - 1:l_in, :].astype(jnp.float32)

    inv_k = 1.0 / kernel_size
    if stride == 1:
        o_ref[...] = (acc_ref[...] * inv_k).astype(o_ref.dtype)
    else:
        # The accumulator already lives in scratch, so selecting every stride-th
        # stride-1 window sum is a single strided VMEM read (no extra full copy).
        sel = acc_ref[:, pl.ds(0, l_out, stride=stride), :]
        o_ref[...] = (sel * inv_k).astype(o_ref.dtype)


def moving_avg(x, kernel_size, stride):
    """x: (B, L, C) float array. Returns (B, L_out, C) matching the PyTorch module."""
    assert kernel_size >= 1 and stride >= 1
    B, L, C = x.shape
    assert L >= 1, "moving_avg needs at least one time step"
    front_len = (kernel_size - 1) // 2
    end_len = kernel_size // 2
    l_pad = L + front_len + end_len            # == L + kernel_size - 1 >= kernel_size
    l_out = (l_pad - kernel_size) // stride + 1
    itemsize = jnp.dtype(x.dtype).itemsize

    # --- generation-aware VMEM budget: v7x (64 MiB physical) -> ~32 MiB scoped,
    #     v5e/v6e (128 MiB physical) -> 48 MiB. ---
    try:
        vmem_cap = int(getattr(pltpu.get_tpu_info(), "vmem_capacity_bytes", 64 << 20))
    except Exception:
        vmem_cap = 64 << 20                    # conservative default (v7x-sized)
    vmem_limit = min(48 << 20, vmem_cap // 2)

    # --- channel (lane) tile: halo-free axis.  Keep the full C when the per-batch
    #     block is already small; otherwise tile down to a lane-aligned width that
    #     keeps one input block around the ~2 MiB sweet spot. ---
    target = 2 << 20
    block_c = C
    if L * C * itemsize > target:
        chosen = None
        for cand in (512, 256, 128):           # largest lane-aligned tile in budget
            if C % cand == 0 and cand < C and L * cand * itemsize <= target:
                chosen = cand
                break
        if chosen is None:
            for cand in (128, 256, 512):       # nothing fits: smallest tile bounds VMEM
                if C % cand == 0 and cand < C:
                    chosen = cand
                    break
        if chosen is not None:
            block_c = chosen

    # --- batch folding: amortize the ~0.35 us/grid-step overhead for tiny per-batch
    #     blocks, but keep >= 2 grid points on a parallel axis when B > 1 so both
    #     v7x TensorCores stay busy. ---
    per_batch_bytes = L * block_c * itemsize
    block_b = 1
    if B > 1 and per_batch_bytes < target:
        max_fold = max(1, target // per_batch_bytes)
        if C // block_c == 1:
            max_fold = min(max_fold, max(1, B // 2))
        max_fold = int(min(max_fold, B))
        for d in range(max_fold, 0, -1):
            if B % d == 0:
                block_b = d
                break
    grid = (B // block_b, C // block_c)

    # --- VMEM sanity: 2x double-buffered in + 2x out + f32 accumulator scratch. ---
    in_bytes = block_b * L * block_c * itemsize
    out_bytes = block_b * l_out * block_c * itemsize
    acc_bytes = block_b * L * block_c * 4
    est = 2 * in_bytes + 2 * out_bytes + acc_bytes + (1 << 20)
    if est > vmem_limit:
        vmem_limit = min(int(vmem_cap * 0.9), est)

    kern = functools.partial(
        _moving_avg_kernel,
        kernel_size=kernel_size,
        stride=stride,
        front_len=front_len,
        end_len=end_len,
        l_out=l_out,
    )

    return pl.pallas_call(
        kern,
        out_shape=jax.ShapeDtypeStruct((B, l_out, C), x.dtype),
        grid_spec=pltpu.PrefetchScalarGridSpec(
            num_scalar_prefetch=0,
            grid=grid,
            in_specs=[pl.BlockSpec((block_b, L, block_c), lambda b, c: (b, 0, c))],
            out_specs=pl.BlockSpec((block_b, l_out, block_c), lambda b, c: (b, 0, c)),
            scratch_shapes=[pltpu.VMEM((block_b, L, block_c), jnp.float32)],
        ),
        compiler_params=pltpu.CompilerParams(
            dimension_semantics=("parallel", "parallel"),
            vmem_limit_bytes=int(vmem_limit),
        ),
    )(x)


def _moving_avg_reference(x, kernel_size, stride):
    """Pure-JAX reference matching the PyTorch module exactly."""
    front = jnp.repeat(x[:, 0:1, :], (kernel_size - 1) // 2, axis=1)
    end = jnp.repeat(x[:, -1:, :], kernel_size // 2, axis=1)
    xp = jnp.concatenate([front, x, end], axis=1)  # (B, L_pad, C)
    l_pad = xp.shape[1]
    l_out = (l_pad - kernel_size) // stride + 1
    windows = jnp.stack(
        [xp[:, i * stride:i * stride + kernel_size, :] for i in range(l_out)], axis=1
    )  # (B, l_out, k, C)
    return jnp.mean(windows, axis=2)


if __name__ == "__main__":
    # moving_avg(kernel_size=5, stride=1); input (B=2, L=16, C=32)
    kernel_size, stride = 5, 1
    B, L, C = 2, 16, 32

    key = jax.random.PRNGKey(0)
    x = jax.random.normal(key, (B, L, C), dtype=jnp.float32)

    out = jax.block_until_ready(moving_avg(x, kernel_size, stride))
    ref = _moving_avg_reference(x, kernel_size, stride)

    assert out.shape == ref.shape, (out.shape, ref.shape)
    err = float(jnp.max(jnp.abs(out - ref)))
    assert err < 1e-5, err

    print("KERNEL_OK")
</pallas_src>

<mosaic_0001>
module attributes {stable_mosaic.version = 11 : i64} {
  func.func @_moving_avg_kernel(%arg0: i32, %arg1: i32, %arg2: memref<1x16x32xf32, #tpu.memory_space<vmem>>, %arg3: memref<1x16x32xf32, #tpu.memory_space<vmem>>, %arg4: memref<1x16x32xf32, #tpu.memory_space<vmem>>) attributes {dimension_semantics = [#tpu.dimension_semantics<parallel>, #tpu.dimension_semantics<parallel>], iteration_bounds = array<i64: 2, 1>, scalar_prefetch = 0 : i64, scratch_operands = 1 : i64, tpu.core_type = #tpu.core_type<tc>, window_params = [{transform_indices = @transform_0, window_bounds = array<i64: 1, 16, 32>}, {transform_indices = @transform_1, window_bounds = array<i64: 1, 16, 32>}]} {
    %c0 = arith.constant 0 : index
    %c0_0 = arith.constant 0 : index
    %c0_1 = arith.constant 0 : index
    %0 = vector.load %arg2[%c0, %c0_0, %c0_1] : memref<1x16x32xf32, #tpu.memory_space<vmem>>, vector<1x16x32xf32>
    %c0_2 = arith.constant 0 : index
    %c0_3 = arith.constant 0 : index
    %c0_4 = arith.constant 0 : index
    %1 = vector.load %arg4[%c0_2, %c0_3, %c0_4] : memref<1x16x32xf32, #tpu.memory_space<vmem>>, vector<1x16x32xf32>
    tpu.vector_store %arg4[%c0_2, %c0_3, %c0_4], %0 {strides = array<i32>} : memref<1x16x32xf32, #tpu.memory_space<vmem>>, vector<1x16x32xf32>,
    %c0_5 = arith.constant 0 : index
    %c2 = arith.constant 2 : index
    %c0_6 = arith.constant 0 : index
    %2 = vector.load %arg4[%c0_5, %c2, %c0_6] : memref<1x16x32xf32, #tpu.memory_space<vmem>>, vector<1x14x32xf32>
    %c0_7 = arith.constant 0 : index
    %c0_8 = arith.constant 0 : index
    %c0_9 = arith.constant 0 : index
    %3 = vector.load %arg2[%c0_7, %c0_8, %c0_9] : memref<1x16x32xf32, #tpu.memory_space<vmem>>, vector<1x14x32xf32>
    %4 = arith.addf %2, %3 : vector<1x14x32xf32>
    %c0_10 = arith.constant 0 : index
    %c2_11 = arith.constant 2 : index
    %c0_12 = arith.constant 0 : index
    %5 = vector.load %arg4[%c0_10, %c2_11, %c0_12] : memref<1x16x32xf32, #tpu.memory_space<vmem>>, vector<1x14x32xf32>
    tpu.vector_store %arg4[%c0_10, %c2_11, %c0_12], %4 {strides = array<i32>} : memref<1x16x32xf32, #tpu.memory_space<vmem>>, vector<1x14x32xf32>,
    %c0_13 = arith.constant 0 : index
    %c1 = arith.constant 1 : index
    %c0_14 = arith.constant 0 : index
    %6 = vector.load %arg4[%c0_13, %c1, %c0_14] : memref<1x16x32xf32, #tpu.memory_space<vmem>>, vector<1x15x32xf32>
    %c0_15 = arith.constant 0 : index
    %c0_16 = arith.constant 0 : index
    %c0_17 = arith.constant 0 : index
    %7 = vector.load %arg2[%c0_15, %c0_16, %c0_17] : memref<1x16x32xf32, #tpu.memory_space<vmem>>, vector<1x15x32xf32>
    %8 = arith.addf %6, %7 : vector<1x15x32xf32>
    %c0_18 = arith.constant 0 : index
    %c1_19 = arith.constant 1 : index
    %c0_20 = arith.constant 0 : index
    %9 = vector.load %arg4[%c0_18, %c1_19, %c0_20] : memref<1x16x32xf32, #tpu.memory_space<vmem>>, vector<1x15x32xf32>
    tpu.vector_store %arg4[%c0_18, %c1_19, %c0_20], %8 {strides = array<i32>} : memref<1x16x32xf32, #tpu.memory_space<vmem>>, vector<1x15x32xf32>,
    %c0_21 = arith.constant 0 : index
    %c0_22 = arith.constant 0 : index
    %c0_23 = arith.constant 0 : index
    %10 = vector.load %arg4[%c0_21, %c0_22, %c0_23] : memref<1x16x32xf32, #tpu.memory_space<vmem>>, vector<1x15x32xf32>
    %c0_24 = arith.constant 0 : index
    %c1_25 = arith.constant 1 : index
    %c0_26 = arith.constant 0 : index
    %11 = vector.load %arg2[%c0_24, %c1_25, %c0_26] : memref<1x16x32xf32, #tpu.memory_space<vmem>>, vector<1x15x32xf32>
    %12 = arith.addf %10, %11 : vector<1x15x32xf32>
    %c0_27 = arith.constant 0 : index
    %c0_28 = arith.constant 0 : index
    %c0_29 = arith.constant 0 : index
    %13 = vector.load %arg4[%c0_27, %c0_28, %c0_29] : memref<1x16x32xf32, #tpu.memory_space<vmem>>, vector<1x15x32xf32>
    tpu.vector_store %arg4[%c0_27, %c0_28, %c0_29], %12 {strides = array<i32>} : memref<1x16x32xf32, #tpu.memory_space<vmem>>, vector<1x15x32xf32>,
    %c0_30 = arith.constant 0 : index
    %c0_31 = arith.constant 0 : index
    %c0_32 = arith.constant 0 : index
    %14 = vector.load %arg4[%c0_30, %c0_31, %c0_32] : memref<1x16x32xf32, #tpu.memory_space<vmem>>, vector<1x14x32xf32>
    %c0_33 = arith.constant 0 : index
    %c2_34 = arith.constant 2 : index
    %c0_35 = arith.constant 0 : index
    %15 = vector.load %arg2[%c0_33, %c2_34, %c0_35] : memref<1x16x32xf32, #tpu.memory_space<vmem>>, vector<1x14x32xf32>
    %16 = arith.addf %14, %15 : vector<1x14x32xf32>
    %c0_36 = arith.constant 0 : index
    %c0_37 = arith.constant 0 : index
    %c0_38 = arith.constant 0 : index
    %17 = vector.load %arg4[%c0_36, %c0_37, %c0_38] : memref<1x16x32xf32, #tpu.memory_space<vmem>>, vector<1x14x32xf32>
    tpu.vector_store %arg4[%c0_36, %c0_37, %c0_38], %16 {strides = array<i32>} : memref<1x16x32xf32, #tpu.memory_space<vmem>>, vector<1x14x32xf32>,
    %18 = tpu.iota {dimensions = array<i32: 1>} : vector<1x2x32xi32>
    %19 = arith.sitofp %18 : vector<1x2x32xi32> to vector<1x2x32xf32>
    %cst = arith.constant 2.000000e+00 : f32
    %20 = vector.broadcast %cst : f32 to vector<1x2x32xf32>
    %21 = arith.subf %20, %19 : vector<1x2x32xf32>
    %c0_39 = arith.constant 0 : index
    %c0_40 = arith.constant 0 : index
    %c0_41 = arith.constant 0 : index
    %22 = vector.load %arg4[%c0_39, %c0_40, %c0_41] : memref<1x16x32xf32, #tpu.memory_space<vmem>>, vector<1x2x32xf32>
    %c0_42 = arith.constant 0 : index
    %c0_43 = arith.constant 0 : index
    %c0_44 = arith.constant 0 : index
    %23 = vector.load %arg2[%c0_42, %c0_43, %c0_44] : memref<1x16x32xf32, #tpu.memory_space<vmem>>, vector<1x1x32xf32>
    %24 = vector.broadcast %23 : vector<1x1x32xf32> to vector<1x2x32xf32>
    %25 = arith.mulf %21, %24 : vector<1x2x32xf32>
    %26 = arith.addf %22, %25 : vector<1x2x32xf32>
    %c0_45 = arith.constant 0 : index
    %c0_46 = arith.constant 0 : index
    %c0_47 = arith.constant 0 : index
    %27 = vector.load %arg4[%c0_45, %c0_46, %c0_47] : memref<1x16x32xf32, #tpu.memory_space<vmem>>, vector<1x2x32xf32>
    tpu.vector_store %arg4[%c0_45, %c0_46, %c0_47], %26 {strides = array<i32>} : memref<1x16x32xf32, #tpu.memory_space<vmem>>, vector<1x2x32xf32>,
    %28 = tpu.iota {dimensions = array<i32: 1>} : vector<1x2x32xi32>
    %29 = arith.sitofp %28 : vector<1x2x32xi32> to vector<1x2x32xf32>
    %cst_48 = arith.constant 1.000000e+00 : f32
    %30 = vector.broadcast %cst_48 : f32 to vector<1x2x32xf32>
    %31 = arith.addf %30, %29 : vector<1x2x32xf32>
    %c0_49 = arith.constant 0 : index
    %c14 = arith.constant 14 : index
    %c0_50 = arith.constant 0 : index
    %32 = vector.load %arg4[%c0_49, %c14, %c0_50] : memref<1x16x32xf32, #tpu.memory_space<vmem>>, vector<1x2x32xf32>
    %c0_51 = arith.constant 0 : index
    %c15 = arith.constant 15 : index
    %c0_52 = arith.constant 0 : index
    %33 = vector.load %arg2[%c0_51, %c15, %c0_52] : memref<1x16x32xf32, #tpu.memory_space<vmem>>, vector<1x1x32xf32>
    %34 = vector.broadcast %33 : vector<1x1x32xf32> to vector<1x2x32xf32>
    %35 = arith.mulf %31, %34 : vector<1x2x32xf32>
    %36 = arith.addf %32, %35 : vector<1x2x32xf32>
    %c0_53 = arith.constant 0 : index
    %c14_54 = arith.constant 14 : index
    %c0_55 = arith.constant 0 : index
    %37 = vector.load %arg4[%c0_53, %c14_54, %c0_55] : memref<1x16x32xf32, #tpu.memory_space<vmem>>, vector<1x2x32xf32>
    tpu.vector_store %arg4[%c0_53, %c14_54, %c0_55], %36 {strides = array<i32>} : memref<1x16x32xf32, #tpu.memory_space<vmem>>, vector<1x2x32xf32>,
    %c0_56 = arith.constant 0 : index
    %c0_57 = arith.constant 0 : index
    %c0_58 = arith.constant 0 : index
    %38 = vector.load %arg4[%c0_56, %c0_57, %c0_58] : memref<1x16x32xf32, #tpu.memory_space<vmem>>, vector<1x16x32xf32>
    %cst_59 = arith.constant 2.000000e-01 : f32
    %39 = vector.broadcast %cst_59 : f32 to vector<1x16x32xf32>
    %40 = arith.mulf %38, %39 : vector<1x16x32xf32>
    %c0_60 = arith.constant 0 : index
    %c0_61 = arith.constant 0 : index
    %c0_62 = arith.constant 0 : index
    %41 = vector.load %arg3[%c0_60, %c0_61, %c0_62] : memref<1x16x32xf32, #tpu.memory_space<vmem>>, vector<1x16x32xf32>
    tpu.vector_store %arg3[%c0_60, %c0_61, %c0_62], %40 {strides = array<i32>} : memref<1x16x32xf32, #tpu.memory_space<vmem>>, vector<1x16x32xf32>,
    return
  }
  func.func @transform_0(%arg0: i32, %arg1: i32) -> (i32, i32, i32) {
    %c0_i32 = arith.constant 0 : i32
    %c0_i32_0 = arith.constant 0 : i32
    return %arg0, %c0_i32, %arg1 : i32, i32, i32
  }
  func.func @transform_1(%arg0: i32, %arg1: i32) -> (i32, i32, i32) {
    %c0_i32 = arith.constant 0 : i32
    %c0_i32_0 = arith.constant 0 : i32
    return %arg0, %c0_i32, %arg1 : i32, i32, i32
  }
}

</mosaic_0001>

<llo_original>
// kernel: tpu_custom_call.1
$region0: #{tpu_custom_call.1}
  #allocation0 [shape = 'u32[]', space=smem, size = 0x4, offset = 0x4, fixed_abs, tag = 'smem constant byte address 0x4 - core index']
  #allocation1 [shape = 'u32[144,128]{1,0:T(1,128)}', space=vmem, size = 0x12000, scoped, tag = 'internal scratch']
  #allocation2 [shape = 'f32[1,16,32]{2,1,0:T(8,128)}', space=vmem, size = 0x2000, scoped, tag = 'scratch operand']
  %s0 = inlined_call_operand.hbm [shape: f32[2,16,32], index: 0, kind: input, shape index: {}]
  %s1 = inlined_call_operand.hbm [shape: f32[2,16,32], index: 1, kind: output, shape index: {}]
  %s2 = sld [smem:[#allocation0]]
  $region41: #{tpu_custom_call.1} parent=0
    _
  %s4 = ssub.s32 1, %s2
  %s5 = scalar_select 0, %s4, %s2
  $region1: #{tpu_custom_call.1} parent=0
    #allocation3 [shape = 'u8[16384]{0}', space=vmem, size = 0x4000, scoped, tag = 'input window, operand 0']
    #allocation4 [shape = 's32[2]{0}', space=sflag, size = 0x8, scoped, tag = 'scoped memory for tpu_custom_call.1']
    #allocation5 [shape = 's32[2]{0}', space=sflag, size = 0x8, scoped, tag = 'scoped memory for tpu_custom_call.1']
    #allocation6 [shape = 'u8[16384]{0}', space=vmem, size = 0x4000, scoped, tag = 'output window, operand 0']
    %6 = vsyncpa [#allocation4], 0
    %s7 = scalar_lea.sflag [#allocation4], 1
    %8 = vsyncpa %s7, 0
    %9 = vsyncpa [#allocation5], 0
    %s10 = scalar_lea.sflag [#allocation5], 1
    %11 = vsyncpa %s10, 0
    loop: start=0, step=1, limit=4
    $region2: #{tpu_custom_call.1} parent=1 // loop_pre_header
      _
    $region3: #{tpu_custom_call.1} parent=1 // loop_header
      %s13 = sphi 0, %s17
      %p14 = scmp.ge.s32.totalorder %s13, 4
      %s20 = sphi 0, %s32
      %s21 = sphi 0, %s28
      %s22 = sphi 0, %s20
      %s23 = sphi 0, %s21
      %s24 = sphi 0, %s22
      %s25 = sphi 0, %s23
      %s37 = sphi 0, %s39
      %s40 = sphi 0, %s37
      %s41 = sphi 0, %s40
      %s57 = sphi 0, %s41
      %s65 = sphi 0, %s67
      %s68 = sphi 0, %s65
      %s69 = sphi 0, %s68
      %s85 = sphi 0, %s69
    $region4: #{tpu_custom_call.1} parent=1 // loop_header_branch
      %16 = sbr.rel (%p14) target = $region8
    $region5: #{tpu_custom_call.1} parent=1 // loop_body
      %s18 = ssub.s32 %s13, 1
      %s19 = ssub.s32 %s13, 2
      %s26 = sadd.s32 1, %s21
      %p27 = scmp.ge.s32.totalorder %s26, 1
      %s28 = scalar_select %p27, 0, %s26
      %s29 = sadd.s32 1, %s20
      %s30 = scalar_select %p27, %s29, %s20
      %p31 = scmp.ge.s32.totalorder %s30, 2
      %s32 = scalar_select %p31, 0, %s30
      %s33 = ssub.s32 %s20, %s32
      %s34 = ssub.s32 %s21, %s28
      %s35 = sor.u32 %s33, %s34
      %p36 = scmp.eq.s32.totalorder %s35, 0
      %s38 = sadd.s32 %s37, 1
      %s39 = scalar_select %p36, %s37, %s38
      %p42 = pneg %p36
      %p43 = scmp.eq.s32.totalorder %s13, 1
      %p44 = por %p42, %p43
      %p45 = scmp.ne.s32.totalorder %s37, %s40
      %p46 = scmp.eq.s32.totalorder %s13, 0
      %p47 = por %p45, %p46
      %p48 = scmp.ne.s32.totalorder %s37, %s40
      %p49 = scmp.eq.s32.totalorder %s18, 1
      %p50 = por %p48, %p49
      %p51 = scmp.ne.s32.totalorder %s40, %s41
      %p52 = scmp.eq.s32.totalorder %s18, 0
      %p53 = por %p51, %p52
      %p54 = scmp.ne.s32.totalorder %s40, %s41
      %p55 = scmp.eq.s32.totalorder %s19, 1
      %p56 = por %p54, %p55
      %p58 = scmp.ne.s32.totalorder %s41, %s57
      %p59 = scmp.eq.s32.totalorder %s19, 0
      %p60 = por %p58, %p59
      %s61 = ssub.s32 %s20, %s32
      %s62 = ssub.s32 %s21, %s28
      %s63 = sor.u32 %s61, %s62
      %p64 = scmp.eq.s32.totalorder %s63, 0
      %s66 = sadd.s32 %s65, 1
      %s67 = scalar_select %p64, %s65, %s66
      %p70 = pneg %p64
      %p71 = scmp.eq.s32.totalorder %s13, 1
      %p72 = por %p70, %p71
      %p73 = scmp.ne.s32.totalorder %s65, %s68
      %p74 = scmp.eq.s32.totalorder %s13, 0
      %p75 = por %p73, %p74
      %p76 = scmp.ne.s32.totalorder %s65, %s68
      %p77 = scmp.eq.s32.totalorder %s18, 1
      %p78 = por %p76, %p77
      %p79 = scmp.ne.s32.totalorder %s68, %s69
      %p80 = scmp.eq.s32.totalorder %s18, 0
      %p81 = por %p79, %p80
      %p82 = scmp.ne.s32.totalorder %s68, %s69
      %p83 = scmp.eq.s32.totalorder %s19, 1
      %p84 = por %p82, %p83
      %p86 = scmp.ne.s32.totalorder %s69, %s85
      %p87 = scmp.eq.s32.totalorder %s19, 0
      %p88 = por %p86, %p87
      %p89 = scmp.le.s32.totalorder 1, %s13
      %p90 = scmp.lt.s32.totalorder %s13, 3
      %p91 = pnand %p89, %p90
      %p92 = pneg %p91
      // Predicated region
      $region9: #{tpu_custom_call.1} parent=5 // pred_check
        _
      $region10: #{tpu_custom_call.1} parent=5 // pred_check_branch
        %94 = sbr.rel (%p91) target = $region12
      $region11: #{tpu_custom_call.1} parent=5 // pred_region
        %s95 = ssub.s32 %s13, 1
      $region12: #{tpu_custom_call.1} parent=5 // pred_fallthru
        _
      %p96 = scmp.lt.s32.totalorder %s13, 2
      // Predicated region
      $region13: #{tpu_custom_call.1} parent=5 // pred_check
        %p97 = pneg %p96
      $region14: #{tpu_custom_call.1} parent=5 // pred_check_branch
        %99 = sbr.rel (%p97) target = $region16
      $region15: #{tpu_custom_call.1} parent=5 // pred_region
        // Predicated region
        $region17: #{tpu_custom_call.1} parent=15 // pred_check
          %p100 = pneg %p47
        $region18: #{tpu_custom_call.1} parent=15 // pred_check_branch
          %102 = sbr.rel (%p100) target = $region20
        $region19: #{tpu_custom_call.1} parent=15 // pred_region
          %s103 = sand.u32 %s37, 1
          %s104 = scalar_lea.sflag [#allocation4], %s103
          %s105 = sand.u32 %s37, 1
          %s106 = smul.addr %s105, 16
          %s107 = scalar_lea.vmem [#allocation3], %s106
          %s109 = ssub.s32 256, 256
          %110 = vsyncadd %s104, %s109
          %s111 = smul.addr %s20, 2
          %s112 = sadd.s32 %s21, %s111
          %s113 = smul.addr %s112, 128
          %s114 = scalar_lea.hbm %s0, %s113
          %s115 = sshll.u32 %s107, 4
          %s116 = int_to_ptr.vmem [resolvable:$true] %s115
          %121 = dma.hbm_to_vmem [thread:$0]  %s114, 256, %s116, %s104, 128, 128, 8
        $region20: #{tpu_custom_call.1} parent=15 // pred_fallthru
          _
      $region16: #{tpu_custom_call.1} parent=5 // pred_fallthru
        _
      %p122 = scmp.le.s32.totalorder 1, %s13
      %p123 = scmp.lt.s32.totalorder %s13, 3
      %p124 = pnand %p122, %p123
      %p125 = pneg %p124
      // Predicated region
      $region21: #{tpu_custom_call.1} parent=5 // pred_check
        _
      $region22: #{tpu_custom_call.1} parent=5 // pred_check_branch
        %127 = sbr.rel (%p124) target = $region24
      $region23: #{tpu_custom_call.1} parent=5 // pred_region
        %s128 = ssub.s32 %s13, 1
        %s129 = sand.u32 %s40, 1
        %s130 = scalar_lea.sflag [#allocation4], %s129
        %s131 = sand.u32 %s40, 1
        %s132 = smul.addr %s131, 16
        %s133 = scalar_lea.vmem [#allocation3], %s132
        // Predicated region
        $region25: #{tpu_custom_call.1} parent=23 // pred_check
          %p134 = pneg %p53
        $region26: #{tpu_custom_call.1} parent=23 // pred_check_branch
          %136 = sbr.rel (%p134) target = $region28
        $region27: #{tpu_custom_call.1} parent=23 // pred_region
          %137 = dma.done %s130, 256
        $region28: #{tpu_custom_call.1} parent=23 // pred_fallthru
          _
        %s138 = sand.u32 %s40, 1
        %s139 = scalar_lea.sflag [#allocation4], %s138
        %s140 = sand.u32 %s40, 1
        %s141 = smul.addr %s140, 16
        %s142 = scalar_lea.vmem [#allocation3], %s141
        %p143 = pneg %p53
        %p144 = pneg %p50
        %p145 = pneg %p81
        %p146 = pneg %p78
        %s147 = sand.u32 %s68, 1
        %s148 = scalar_lea.sflag [#allocation5], %s147
        %s149 = sand.u32 %s68, 1
        %s150 = smul.addr %s149, 16
        %s151 = scalar_lea.vmem [#allocation6], %s150
        %v152 = vld [vmem:[%s133] sm:$0xff]
        %v153 = vld [vmem:[%s133 + $0x8] sm:$0xff]
        %vm154 = vcmask 261120
        %155 = vst.msk [vmem:[#allocation2] sm:$0xff] %vm154, %v152
        %156 = vst.msk [vmem:[#allocation2 + $0x8] sm:$0xff] %vm154, %v153
        %v157 = vld [vmem:[#allocation2 + $0x2] sm:$0xff]
        %v158 = vld [vmem:[#allocation2 + $0xa] sm:$0x3f]
        %v159 = vld [vmem:[%s133] sm:$0xff]
        %v160 = vld [vmem:[%s133 + $0x8] sm:$0x3f]
        %v161 = vadd.f32 %v157, %v159
        %v162 = vadd.f32 %v158, %v160
        %163 = vst.msk [vmem:[#allocation2 + $0x2] sm:$0xff] %vm154, %v161
        %vm164 = vcmask 259072
        %165 = vst.msk [vmem:[#allocation2 + $0xa] sm:$0x3f] %vm164, %v162
        %v166 = vld [vmem:[#allocation2 + $0x1] sm:$0xff]
        %v167 = vld [vmem:[#allocation2 + $0x9] sm:$0x7f]
        %v168 = vld [vmem:[%s133] sm:$0xff]
        %v169 = vld [vmem:[%s133 + $0x8] sm:$0x7f]
        %v170 = vadd.f32 %v166, %v168
        %v171 = vadd.f32 %v167, %v169
        %172 = vst.msk [vmem:[#allocation2 + $0x1] sm:$0xff] %vm154, %v170
        %vm173 = vcmask 260096
        %174 = vst.msk [vmem:[#allocation2 + $0x9] sm:$0x7f] %vm173, %v171
        %v175 = vld [vmem:[#allocation2] sm:$0xff]
        %v176 = vld [vmem:[#allocation2 + $0x8] sm:$0x7f]
        %v177 = vld [vmem:[%s133 + $0x1] sm:$0xff]
        %v178 = vld [vmem:[%s133 + $0x9] sm:$0x7f]
        %v179 = vadd.f32 %v175, %v177
        %v180 = vadd.f32 %v176, %v178
        %181 = vst.msk [vmem:[#allocation2] sm:$0xff] %vm154, %v179
        %182 = vst.msk [vmem:[#allocation2 + $0x8] sm:$0x7f] %vm173, %v180
        %v183 = vld [vmem:[#allocation2] sm:$0xff]
        %v184 = vld [vmem:[#allocation2 + $0x8] sm:$0x3f]
        %v185 = vld [vmem:[%s133 + $0x2] sm:$0xff]
        %v186 = vld [vmem:[%s133 + $0xa] sm:$0x3f]
        %v187 = vadd.f32 %v183, %v185
        %v188 = vadd.f32 %v184, %v186
        %189 = vst.msk [vmem:[#allocation2] sm:$0xff] %vm154, %v187
        %190 = vst.msk [vmem:[#allocation2 + $0x8] sm:$0x3f] %vm164, %v188
        %v191 = vlaneseq
        %v192 = vshrl.u32 %v191, 7
        %v193 = vcvt.s32.f32 %v192
        %v194 = vsub.f32 2.0, %v193
        %v195 = vld [vmem:[#allocation2] sm:$0x3]
        %v196 = vld [vmem:[%s133] sm:$0x1]
        %v197 = vlaneseq
        %v198 = vshrl.u32 %v197, 7
        %v199 = vsub.s32 0, %v198
        %v200 = vrot.slane %v196, %v199
        %v201 = vmul.f32 %v194, %v200
        %v202 = vadd.f32 %v195, %v201
        %vm203 = vcmask 254976
        %204 = vst.msk [vmem:[#allocation2] sm:$0x3] %vm203, %v202
        %v205 = vadd.f32 %v193, 1.0
        %v206 = vld [vmem:[#allocation2 + $0xe] sm:$0x3]
        %v207 = vld [vmem:[%s133 + $0xf] sm:$0x1]
        %v208 = vlaneseq
        %v209 = vshrl.u32 %v208, 7
        %v210 = vsub.s32 0, %v209
        %v211 = vrot.slane %v207, %v210
        %v212 = vmul.f32 %v205, %v211
        %v213 = vadd.f32 %v206, %v212
        %214 = vst.msk [vmem:[#allocation2 + $0xe] sm:$0x3] %vm203, %v213
        %v215 = vld [vmem:[#allocation2] sm:$0xff]
        %v216 = vld [vmem:[#allocation2 + $0x8] sm:$0xff]
        %v217 = vmul.f32 %v215, 0.2
        %v218 = vmul.f32 %v216, 0.2
        %219 = vst.msk [vmem:[%s151] sm:$0xff] %vm154, %v217
        %220 = vst.msk [vmem:[%s151 + $0x8] sm:$0xff] %vm154, %v218
        %s221 = sand.u32 %s68, 1
        %s222 = scalar_lea.sflag [#allocation5], %s221
        %s223 = sand.u32 %s68, 1
        %s224 = smul.addr %s223, 16
        %s225 = scalar_lea.vmem [#allocation6], %s224
        // Predicated region
        $region29: #{tpu_custom_call.1} parent=23 // pred_check
          %p226 = pneg %p78
        $region30: #{tpu_custom_call.1} parent=23 // pred_check_branch
          %228 = sbr.rel (%p226) target = $region32
        $region31: #{tpu_custom_call.1} parent=23 // pred_region
          %s230 = ssub.s32 256, 256
          %231 = vsyncadd %s222, %s230
          %s232 = smul.addr %s22, 2
          %s233 = sadd.s32 %s23, %s232
          %s234 = smul.addr %s233, 128
          %s235 = scalar_lea.hbm %s1, %s234
          %s236 = sshll.u32 %s225, 4
          %s237 = int_to_ptr.vmem [resolvable:$true] %s236
          %242 = dma.vmem_to_hbm [thread:$0]  %s237, 256, %s235, %s222, 128, 128, 8
        $region32: #{tpu_custom_call.1} parent=23 // pred_fallthru
          _
      $region24: #{tpu_custom_call.1} parent=5 // pred_fallthru
        _
      %p243 = scmp.le.s32.totalorder 2, %s13
      // Predicated region
      $region33: #{tpu_custom_call.1} parent=5 // pred_check
        %p244 = pneg %p243
      $region34: #{tpu_custom_call.1} parent=5 // pred_check_branch
        %246 = sbr.rel (%p244) target = $region36
      $region35: #{tpu_custom_call.1} parent=5 // pred_region
        %s247 = ssub.s32 %s13, 2
        // Predicated region
        $region37: #{tpu_custom_call.1} parent=35 // pred_check
          %p248 = pneg %p84
        $region38: #{tpu_custom_call.1} parent=35 // pred_check_branch
          %250 = sbr.rel (%p248) target = $region40
        $region39: #{tpu_custom_call.1} parent=35 // pred_region
          %s251 = sand.u32 %s69, 1
          %s252 = scalar_lea.sflag [#allocation5], %s251
          %s253 = sand.u32 %s69, 1
          %s254 = smul.addr %s253, 16
          %s255 = scalar_lea.vmem [#allocation6], %s254
          %256 = dma.done %s252, 256
        $region40: #{tpu_custom_call.1} parent=35 // pred_fallthru
          _
      $region36: #{tpu_custom_call.1} parent=5 // pred_fallthru
        _
    $region6: #{tpu_custom_call.1} parent=1 // loop_footer
      %s17 = sadd.s32 1, %s13
    $region7: #{tpu_custom_call.1} parent=1 // loop_footer_branch
      %12 = sbr.rel target = $region3
    $region8: #{tpu_custom_call.1} parent=1 // loop_exit
      _
    %257 = vsyncpa [#allocation4], 1
    %s258 = scalar_lea.sflag [#allocation4], 1
    %259 = vsyncpa %s258, 1
    %260 = vsyncpa [#allocation5], 1
    %s261 = scalar_lea.sflag [#allocation5], 1
    %262 = vsyncpa %s261, 1

</llo_original>
